<compile_context>
chip_gen: v7x
topology: tpu7x:2x2x1
jax: 0.10.0
libtpu: 0.0.40
codegen_flags: <defaults>
</compile_context>

<pallas_src>
import jax
import jax.numpy as jnp
from jax import lax
from jax.experimental import pallas as pl
from jax.experimental.pallas import tpu as pltpu


_VMEM_LIMIT = 40 * 1024 * 1024   # explicit scoped-VMEM budget (headroom vs v7x's 64 MiB)
_UNROLL = 4                      # partial unroll of the per-chunk time loop (vreg pressure)


def _round_up(x, m):
    return ((x + m - 1) // m) * m


def _pick_row_tile(M, target=256):
    """Largest multiple of 8 <= target that divides M (M is always a multiple of 8)."""
    if M <= target:
        return M
    start = target - (target % 8)
    for cand in range(start, 7, -8):
        if M % cand == 0:
            return cand
    return 8


def _pick_col_tile(N, target=512):
    """Largest multiple of 128 <= target that divides N (N is a multiple of 128)."""
    if N <= target:
        return N
    start = target - (target % 128)
    for cand in range(start, 127, -128):
        if N % cand == 0:
            return cand
    return 128


# ---------------------------------------------------------------------------
# Hoisted layer-0 input projection:  (M, E)bf16 @ (E, 4Hp)bf16 + bias(f32).
# ---------------------------------------------------------------------------
def matmul_bias_kernel(x_ref, w_ref, b_ref, o_ref):
    acc = jnp.dot(x_ref[...], w_ref[...], preferred_element_type=jnp.float32)
    o_ref[...] = (acc + b_ref[...]).astype(o_ref.dtype)


def project_inputs(x2d, w_t, bias):
    M, K = x2d.shape
    N = w_t.shape[1]
    tm = _pick_row_tile(M)
    tn = _pick_col_tile(N)
    return pl.pallas_call(
        matmul_bias_kernel,
        out_shape=jax.ShapeDtypeStruct((M, N), jnp.bfloat16),
        grid_spec=pltpu.PrefetchScalarGridSpec(
            num_scalar_prefetch=0,
            grid=(M // tm, N // tn),
            in_specs=[
                pl.BlockSpec((tm, K), lambda i, j: (i, 0)),
                pl.BlockSpec((K, tn), lambda i, j: (0, j)),
                pl.BlockSpec((1, tn), lambda i, j: (0, j)),
            ],
            out_specs=pl.BlockSpec((tm, tn), lambda i, j: (i, j)),
        ),
        compiler_params=pltpu.CompilerParams(
            dimension_semantics=("parallel", "parallel"),
            vmem_limit_bytes=_VMEM_LIMIT),
    )(x2d, w_t, bias)


# ---------------------------------------------------------------------------
# Recurrence over one chunk of timesteps.  Gates pre-ordered (i, f, o, g),
# each gate padded to Hp lanes.  Steps t >= valid (time padding) are masked.
# ---------------------------------------------------------------------------
def _run_recurrence(gx_ref, whh, h_scr, c_scr, valid, h_out=None, unroll=_UNROLL):
    Hp = h_scr.shape[1]
    TC = gx_ref.shape[0]

    def step(t, carry):
        @pl.when(t < valid)
        def _():
            # TODO(synk): drive this weight-stationary (pltpu.matmul_push_rhs once
            # per chunk + matmul_acc_lhs per step) so W_hh is not re-fed every step.
            gates = gx_ref[t].astype(jnp.float32) + jnp.dot(
                h_scr[...].astype(jnp.bfloat16), whh,
                preferred_element_type=jnp.float32)
            ifo = jax.nn.sigmoid(gates[:, :3 * Hp])    # one contiguous EUP slab
            g = jnp.tanh(gates[:, 3 * Hp:])
            i = ifo[:, 0 * Hp:1 * Hp]
            f = ifo[:, 1 * Hp:2 * Hp]
            o = ifo[:, 2 * Hp:3 * Hp]
            c = f * c_scr[...] + i * g                  # elementwise kept f32 (v5e-safe)
            h = o * jnp.tanh(c)
            c_scr[...] = c
            h_scr[...] = h
            if h_out is not None:
                h_out[t] = h
        return carry

    lax.fori_loop(0, TC, step, 0, unroll=unroll)


# ---------------------------------------------------------------------------
# Non-final LSTM layer, fused with the NEXT layer's input projection:
# emits gx_next = h_seq @ W_ih_next + b_next instead of h_seq (no HBM round trip).
# ---------------------------------------------------------------------------
def lstm_seq_fused_kernel(t_ref, gx_ref, whh_hbm, wihn_hbm, bn_ref, out_ref,
                          h_scr, c_scr, hch_scr, whh_vmem, wihn_vmem, dma_sem):
    k = pl.program_id(0)

    @pl.when(k == 0)
    def _():
        h_scr[...] = jnp.zeros_like(h_scr)      # h0 = zeros
        c_scr[...] = jnp.zeros_like(c_scr)      # c0 = zeros
        hch_scr[...] = jnp.zeros_like(hch_scr)
        # Single-buffered resident weights: one DMA, no per-chunk double buffering.
        cp_whh = pltpu.make_async_copy(whh_hbm, whh_vmem, dma_sem.at[0])
        cp_wih = pltpu.make_async_copy(wihn_hbm, wihn_vmem, dma_sem.at[1])
        cp_whh.start()
        cp_wih.start()
        cp_whh.wait()
        cp_wih.wait()

    TC, Bp, _ = hch_scr.shape
    Hp = h_scr.shape[1]
    valid = jnp.minimum(TC, t_ref[0] - k * TC)
    _run_recurrence(gx_ref, whh_vmem[...], h_scr, c_scr, valid, h_out=hch_scr)

    # Fused next-layer input projection for this chunk (one MXU matmul per chunk).
    hs = hch_scr[...].reshape(TC * Bp, Hp).astype(jnp.bfloat16)
    gx_next = jnp.dot(hs, wihn_vmem[...],
                      preferred_element_type=jnp.float32) + bn_ref[...]
    out_ref[...] = gx_next.reshape(TC, Bp, -1).astype(out_ref.dtype)


def lstm_seq_fused(t_len, gx, w_hh_t, w_ih_next_t, bias_next, max_chunk=32):
    Tpad, Bp, G4 = gx.shape
    Hp = w_hh_t.shape[0]
    G4n = w_ih_next_t.shape[1]
    TC = min(Tpad, max_chunk)
    return pl.pallas_call(
        lstm_seq_fused_kernel,
        out_shape=jax.ShapeDtypeStruct((Tpad, Bp, G4n), jnp.bfloat16),
        grid_spec=pltpu.PrefetchScalarGridSpec(
            num_scalar_prefetch=1,
            grid=(Tpad // TC,),
            in_specs=[
                pl.BlockSpec((TC, Bp, G4), lambda k, t: (k, 0, 0)),
                pl.BlockSpec(memory_space=pl.ANY),     # W_hh (manual single buffer)
                pl.BlockSpec(memory_space=pl.ANY),     # W_ih of the next layer
                pl.BlockSpec((1, G4n), lambda k, t: (0, 0)),
            ],
            out_specs=pl.BlockSpec((TC, Bp, G4n), lambda k, t: (k, 0, 0)),
            scratch_shapes=[
                pltpu.VMEM((Bp, Hp), jnp.float32),       # h
                pltpu.VMEM((Bp, Hp), jnp.float32),       # c
                pltpu.VMEM((TC, Bp, Hp), jnp.float32),   # chunk hidden states
                pltpu.VMEM((Hp, G4), jnp.bfloat16),      # resident W_hh
                pltpu.VMEM((Hp, G4n), jnp.bfloat16),     # resident W_ih_next
                pltpu.SemaphoreType.DMA((2,)),
            ],
        ),
        compiler_params=pltpu.CompilerParams(
            dimension_semantics=("arbitrary",),          # chunks carry h/c -> sequential
            vmem_limit_bytes=_VMEM_LIMIT),
    )(t_len, gx, w_hh_t, w_ih_next_t, bias_next)


# ---------------------------------------------------------------------------
# Final LSTM layer fused with the classifier head: only (Bp, Cp) logits written.
# ---------------------------------------------------------------------------
def lstm_last_fc_kernel(t_ref, gx_ref, whh_hbm, fcw_hbm, fcb_ref, out_ref,
                        h_scr, c_scr, whh_vmem, fcw_vmem, dma_sem):
    k = pl.program_id(0)

    @pl.when(k == 0)
    def _():
        h_scr[...] = jnp.zeros_like(h_scr)
        c_scr[...] = jnp.zeros_like(c_scr)
        cp_whh = pltpu.make_async_copy(whh_hbm, whh_vmem, dma_sem.at[0])
        cp_fcw = pltpu.make_async_copy(fcw_hbm, fcw_vmem, dma_sem.at[1])
        cp_whh.start()
        cp_fcw.start()
        cp_whh.wait()
        cp_fcw.wait()

    TC = gx_ref.shape[0]
    valid = jnp.minimum(TC, t_ref[0] - k * TC)
    _run_recurrence(gx_ref, whh_vmem[...], h_scr, c_scr, valid)

    @pl.when(k == pl.num_programs(0) - 1)
    def _():
        # out[:, -1, :] -> dropout (identity in eval) -> fc, all fused here.
        out_ref[...] = (jnp.dot(h_scr[...].astype(jnp.bfloat16), fcw_vmem[...],
                                preferred_element_type=jnp.float32)
                        + fcb_ref[...]).astype(out_ref.dtype)


def lstm_last_fc(t_len, gx, w_hh_t, fc_w_t, fc_b, max_chunk=32):
    Tpad, Bp, G4 = gx.shape
    Hp = w_hh_t.shape[0]
    Cp = fc_w_t.shape[1]
    TC = min(Tpad, max_chunk)
    return pl.pallas_call(
        lstm_last_fc_kernel,
        out_shape=jax.ShapeDtypeStruct((Bp, Cp), jnp.float32),
        grid_spec=pltpu.PrefetchScalarGridSpec(
            num_scalar_prefetch=1,
            grid=(Tpad // TC,),
            in_specs=[
                pl.BlockSpec((TC, Bp, G4), lambda k, t: (k, 0, 0)),
                pl.BlockSpec(memory_space=pl.ANY),     # W_hh
                pl.BlockSpec(memory_space=pl.ANY),     # fc weight
                pl.BlockSpec((1, Cp), lambda k, t: (0, 0)),
            ],
            out_specs=pl.BlockSpec((Bp, Cp), lambda k, t: (0, 0)),
            scratch_shapes=[
                pltpu.VMEM((Bp, Hp), jnp.float32),
                pltpu.VMEM((Bp, Hp), jnp.float32),
                pltpu.VMEM((Hp, G4), jnp.bfloat16),
                pltpu.VMEM((Hp, Cp), jnp.bfloat16),
                pltpu.SemaphoreType.DMA((2,)),
            ],
        ),
        compiler_params=pltpu.CompilerParams(
            dimension_semantics=("arbitrary",),
            vmem_limit_bytes=_VMEM_LIMIT),
    )(t_len, gx, w_hh_t, fc_w_t, fc_b)


# ---------------------------------------------------------------------------
# Full forward pass (embedding / reshapes / padding are plain-JAX glue).
# ---------------------------------------------------------------------------
def rnn_lstm_forward(params, x_ids, max_chunk=32):
    # x.long(); embedding lookup -> (B, T, E)
    emb = jnp.take(params["embedding"], x_ids.astype(jnp.int32), axis=0)
    B, T, E = emb.shape
    Bp = _round_up(B, 8)

    TC = min(T, max_chunk)
    n_chunks = pl.cdiv(T, TC)
    Tpad = n_chunks * TC

    # Transpose the SMALL (B,T,E) embedding tensor to time-major (never the
    # 4Hp-wide gate slab); pad batch -> 8 sublanes and time -> whole chunks.
    emb_tm = jnp.transpose(emb, (1, 0, 2))
    emb_tm = jnp.pad(emb_tm, ((0, Tpad - T), (0, Bp - B), (0, 0)))
    x2d = emb_tm.reshape(Tpad * Bp, E).astype(jnp.bfloat16)

    # Layer-0 input projection hoisted out of the recurrence.
    layer0 = params["lstm"][0]
    gx = project_inputs(x2d, layer0["w_ih_t"], layer0["bias"])
    gx = gx.reshape(Tpad, Bp, -1)                         # time-major gate slab (bf16)

    t_len = jnp.array([T], dtype=jnp.int32)               # real length; masks padded steps
    n_layers = len(params["lstm"])
    for li in range(n_layers - 1):
        nxt = params["lstm"][li + 1]
        gx = lstm_seq_fused(t_len, gx, params["lstm"][li]["w_hh_t"],
                            nxt["w_ih_t"], nxt["bias"], max_chunk=max_chunk)
        # TODO(synk): nn.LSTM inter-layer dropout (p=0.4) is identity in eval mode.

    logits = lstm_last_fc(t_len, gx, params["lstm"][-1]["w_hh_t"],
                          params["fc_w_t"], params["fc_b"], max_chunk=max_chunk)
    # TODO(synk): nn.Dropout(drop_prob) before fc is identity in eval mode.
    return logits[:B, :params["num_classes"]]


# ---------------------------------------------------------------------------
# Parameter init (PyTorch default distributions) + kernel-friendly repacking:
#   gate order (i,f,g,o) -> (i,f,o,g), each gate padded H -> Hp (lane multiple),
#   weights transposed to (in_dim, 4Hp) and cast to bf16; fc padded to (Hp, Cp).
# ---------------------------------------------------------------------------
def _prep_lstm_layer(w_ih, w_hh, b_ih, b_hh, H, Hp, pad_in_rows):
    def reorder_rows(w):                        # rows grouped by gate: i,f,g,o -> i,f,o,g
        i, f, g, o = jnp.split(w, 4, axis=0)
        return jnp.concatenate([i, f, o, g], axis=0)

    w_ih_t = reorder_rows(w_ih).T               # (in_dim, 4H)
    w_hh_t = reorder_rows(w_hh).T               # (H, 4H)
    bi, bf_, bg, bo = jnp.split(b_ih + b_hh, 4)
    b = jnp.concatenate([bi, bf_, bo, bg])      # (4H,) in (i,f,o,g) order

    def pad_gate_cols(w2d):
        parts = jnp.split(w2d, 4, axis=1)
        return jnp.concatenate(
            [jnp.pad(p, ((0, 0), (0, Hp - H))) for p in parts], axis=1)

    # TODO(synk): for H << 128 the per-gate pad to Hp costs up to 4x gate-slab
    # memory/FLOPs; acceptable in this latency-bound regime.
    w_ih_t = pad_gate_cols(w_ih_t)              # (in_dim, 4Hp)
    w_hh_t = pad_gate_cols(w_hh_t)              # (H, 4Hp)
    bias = jnp.concatenate(
        [jnp.pad(p, (0, Hp - H)) for p in jnp.split(b, 4)]).reshape(1, 4 * Hp)

    w_hh_t = jnp.pad(w_hh_t, ((0, Hp - H), (0, 0)))      # rows for padded h lanes
    if pad_in_rows:
        w_ih_t = jnp.pad(w_ih_t, ((0, Hp - H), (0, 0)))
    return {"w_ih_t": w_ih_t.astype(jnp.bfloat16),       # bf16 MXU operands
            "w_hh_t": w_hh_t.astype(jnp.bfloat16),
            "bias": bias.astype(jnp.float32)}


def init_params(key, vocab_size, embedding_dim, hidden_size, num_layers,
                num_classes):
    H = hidden_size
    Hp = _round_up(H, 128)
    Cp = _round_up(num_classes, 128)
    keys = jax.random.split(key, 1 + 4 * num_layers + 2)
    kit = iter(keys)

    embedding = jax.random.normal(next(kit), (vocab_size, embedding_dim),
                                  jnp.float32)

    bound = float(H) ** -0.5
    raw_layers, prepped = [], []
    for layer in range(num_layers):
        in_dim = embedding_dim if layer == 0 else H
        w_ih = jax.random.uniform(next(kit), (4 * H, in_dim), jnp.float32,
                                  -bound, bound)
        w_hh = jax.random.uniform(next(kit), (4 * H, H), jnp.float32,
                                  -bound, bound)
        b_ih = jax.random.uniform(next(kit), (4 * H,), jnp.float32,
                                  -bound, bound)
        b_hh = jax.random.uniform(next(kit), (4 * H,), jnp.float32,
                                  -bound, bound)
        raw_layers.append((w_ih, w_hh, b_ih, b_hh))
        prepped.append(_prep_lstm_layer(w_ih, w_hh, b_ih, b_hh, H, Hp,
                                        pad_in_rows=(layer > 0)))

    fc_w = jax.random.uniform(next(kit), (num_classes, H), jnp.float32,
                              -bound, bound)
    fc_b = jax.random.uniform(next(kit), (num_classes,), jnp.float32,
                              -bound, bound)

    return {
        "embedding": embedding,
        "lstm": prepped,
        "fc_w_t": jnp.pad(fc_w.T, ((0, Hp - H), (0, Cp - num_classes))
                          ).astype(jnp.bfloat16),
        "fc_b": jnp.pad(fc_b, (0, Cp - num_classes)).reshape(1, Cp),
        "hidden_size": H,
        "num_classes": num_classes,
        "raw": {"lstm": raw_layers, "fc_w": fc_w, "fc_b": fc_b},
    }


# ---------------------------------------------------------------------------
# Pure-JAX references.
#   rnn_lstm_ref         : full f32 (PyTorch semantics) -> loose tolerance (bf16 drift)
#   rnn_lstm_ref_matched : mirrors the kernel's bf16-MXU / f32-accumulate choices
#                          -> tight structural-correctness check.
# ---------------------------------------------------------------------------
def rnn_lstm_ref(params, x_ids):
    emb = jnp.take(params["embedding"], x_ids.astype(jnp.int32), axis=0)
    B, T, _ = emb.shape
    H = params["hidden_size"]
    h_seq = emb
    for (w_ih, w_hh, b_ih, b_hh) in params["raw"]["lstm"]:
        h = jnp.zeros((B, H), jnp.float32)
        c = jnp.zeros((B, H), jnp.float32)
        outs = []
        for t in range(T):
            gates = h_seq[:, t] @ w_ih.T + h @ w_hh.T + b_ih + b_hh
            i = jax.nn.sigmoid(gates[:, :H])
            f = jax.nn.sigmoid(gates[:, H:2 * H])
            g = jnp.tanh(gates[:, 2 * H:3 * H])
            o = jax.nn.sigmoid(gates[:, 3 * H:])
            c = f * c + i * g
            h = o * jnp.tanh(c)
            outs.append(h)
        h_seq = jnp.stack(outs, axis=1)
    return h_seq[:, -1] @ params["raw"]["fc_w"].T + params["raw"]["fc_b"]


def rnn_lstm_ref_matched(params, x_ids):
    bf = jnp.bfloat16
    emb = jnp.take(params["embedding"], x_ids.astype(jnp.int32), axis=0)
    B, T, _ = emb.shape
    H = params["hidden_size"]
    x_seq = emb
    for (w_ih, w_hh, b_ih, b_hh) in params["raw"]["lstm"]:
        wih_b = w_ih.T.astype(bf)
        whh_b = w_hh.T.astype(bf)
        bias = (b_ih + b_hh).astype(jnp.float32)
        gx = (jnp.dot(x_seq.astype(bf), wih_b, preferred_element_type=jnp.float32)
              + bias).astype(bf)                       # gate slab stored in bf16
        h = jnp.zeros((B, H), jnp.float32)
        c = jnp.zeros((B, H), jnp.float32)
        outs = []
        for t in range(T):
            gates = gx[:, t].astype(jnp.float32) + jnp.dot(
                h.astype(bf), whh_b, preferred_element_type=jnp.float32)
            i = jax.nn.sigmoid(gates[:, :H])
            f = jax.nn.sigmoid(gates[:, H:2 * H])
            g = jnp.tanh(gates[:, 2 * H:3 * H])
            o = jax.nn.sigmoid(gates[:, 3 * H:])
            c = f * c + i * g
            h = o * jnp.tanh(c)
            outs.append(h)
        x_seq = jnp.stack(outs, axis=1)
    return (jnp.dot(x_seq[:, -1].astype(bf),
                    params["raw"]["fc_w"].T.astype(bf),
                    preferred_element_type=jnp.float32)
            + params["raw"]["fc_b"])


if __name__ == "__main__":
    def run_case(key, vocab, E, H, layers, classes, B, T, max_chunk):
        kp, kx = jax.random.split(key)
        params = init_params(kp, vocab, E, H, layers, classes)
        x_ids = jax.random.randint(kx, (B, T), 0, vocab, dtype=jnp.int32)

        out = jax.block_until_ready(
            rnn_lstm_forward(params, x_ids, max_chunk=max_chunk))
        assert out.shape == (B, classes)

        ref_bf = rnn_lstm_ref_matched(params, x_ids)
        ref_32 = rnn_lstm_ref(params, x_ids)
        err_bf = float(jnp.max(jnp.abs(out - ref_bf)))
        err_32 = float(jnp.max(jnp.abs(out - ref_32)))
        print(f"  B={B} T={T} layers={layers}: "
              f"max|out - bf16_ref|={err_bf:.2e}  max|out - f32_ref|={err_32:.2e}")
        assert err_bf < 1e-2, err_bf     # structural correctness (matched precision)
        assert err_32 < 1e-1, err_32     # overall bf16-vs-f32 drift stays small
        return out

    root = jax.random.PRNGKey(0)
    k1, k2 = jax.random.split(root)
    # Small shapes consistent with the module.
    run_case(k1, vocab=50, E=16, H=32, layers=2, classes=4, B=2, T=8, max_chunk=32)
    # Odd T / B with a forced partial tail chunk (exercises the masked-tail path).
    run_case(k2, vocab=50, E=16, H=32, layers=3, classes=4, B=3, T=7, max_chunk=4)
    print("KERNEL_OK")
</pallas_src>

<mosaic_0001>
module attributes {stable_mosaic.version = 11 : i64} {
  func.func @matmul_bias_kernel(%arg0: i32, %arg1: i32, %arg2: memref<64x16xbf16, #tpu.memory_space<vmem>>, %arg3: memref<16x512xbf16, #tpu.memory_space<vmem>>, %arg4: memref<1x512xf32, #tpu.memory_space<vmem>>, %arg5: memref<64x512xbf16, #tpu.memory_space<vmem>>) attributes {dimension_semantics = [#tpu.dimension_semantics<parallel>, #tpu.dimension_semantics<parallel>], iteration_bounds = array<i64: 1, 1>, scalar_prefetch = 0 : i64, scratch_operands = 0 : i64, tpu.core_type = #tpu.core_type<tc>, window_params = [{transform_indices = @transform_0, window_bounds = array<i64: 64, 16>}, {transform_indices = @transform_1, window_bounds = array<i64: 16, 512>}, {transform_indices = @transform_2, window_bounds = array<i64: 1, 512>}, {transform_indices = @transform_3, window_bounds = array<i64: 64, 512>}]} {
    %c0 = arith.constant 0 : index
    %c0_0 = arith.constant 0 : index
    %0 = vector.load %arg2[%c0, %c0_0] : memref<64x16xbf16, #tpu.memory_space<vmem>>, vector<64x16xbf16>
    %c0_1 = arith.constant 0 : index
    %c0_2 = arith.constant 0 : index
    %1 = vector.load %arg3[%c0_1, %c0_2] : memref<16x512xbf16, #tpu.memory_space<vmem>>, vector<16x512xbf16>
    %cst = arith.constant dense<0.000000e+00> : vector<64x512xf32>
    %2 = tpu.matmul %0, %1, %cst {dimension_numbers = #tpu.dot_dimension_numbers<[1], [0], [0], [1], [0, 0, 1, 1], [], []>} : vector<64x16xbf16>, vector<16x512xbf16>, vector<64x512xf32> -> vector<64x512xf32>
    %c0_3 = arith.constant 0 : index
    %c0_4 = arith.constant 0 : index
    %3 = vector.load %arg4[%c0_3, %c0_4] : memref<1x512xf32, #tpu.memory_space<vmem>>, vector<1x512xf32>
    %4 = vector.broadcast %3 : vector<1x512xf32> to vector<64x512xf32>
    %5 = arith.addf %2, %4 : vector<64x512xf32>
    %6 = arith.truncf %5 : vector<64x512xf32> to vector<64x512xbf16>
    %c0_5 = arith.constant 0 : index
    %c0_6 = arith.constant 0 : index
    %7 = vector.load %arg5[%c0_5, %c0_6] : memref<64x512xbf16, #tpu.memory_space<vmem>>, vector<64x512xbf16>
    tpu.vector_store %arg5[%c0_5, %c0_6], %6 {strides = array<i32>} : memref<64x512xbf16, #tpu.memory_space<vmem>>, vector<64x512xbf16>,
    return
  }
  func.func @transform_0(%arg0: i32, %arg1: i32) -> (i32, i32) {
    %c0_i32 = arith.constant 0 : i32
    %c0_i32_0 = arith.constant 0 : i32
    return %arg0, %c0_i32 : i32, i32
  }
  func.func @transform_1(%arg0: i32, %arg1: i32) -> (i32, i32) {
    %c0_i32 = arith.constant 0 : i32
    %c0_i32_0 = arith.constant 0 : i32
    return %c0_i32, %arg1 : i32, i32
  }
  func.func @transform_2(%arg0: i32, %arg1: i32) -> (i32, i32) {
    %c0_i32 = arith.constant 0 : i32
    %c0_i32_0 = arith.constant 0 : i32
    return %c0_i32, %arg1 : i32, i32
  }
  func.func @transform_3(%arg0: i32, %arg1: i32) -> (i32, i32) {
    %c0_i32 = arith.constant 0 : i32
    return %arg0, %arg1 : i32, i32
  }
}

</mosaic_0001>

<llo_original>
// kernel: tpu_custom_call.1
$region0: #{tpu_custom_call.1}
  #allocation0 [shape = 'u32[]', space=smem, size = 0x4, offset = 0x4, fixed_abs, tag = 'smem constant byte address 0x4 - core index']
  #allocation1 [shape = 'u32[144,128]{1,0:T(1,128)}', space=vmem, size = 0x12000, scoped, tag = 'internal scratch']
  %s0 = inlined_call_operand.vmem [shape: bf16[64,16], index: 0, kind: input, shape index: {}]
  %s1 = inlined_call_operand.vmem [shape: bf16[16,512], index: 1, kind: input, shape index: {}]
  %s2 = inlined_call_operand.vmem [shape: f32[1,512], index: 2, kind: input, shape index: {}]
  %s3 = inlined_call_operand.hbm [shape: bf16[64,512], index: 3, kind: output, shape index: {}]
  %s4 = sld [smem:[#allocation0]]
  $region22: #{tpu_custom_call.1} parent=0
    _
  %s6 = ssub.s32 1, %s4
  %s7 = scalar_select 0, %s6, %s4
  $region1: #{tpu_custom_call.1} parent=0
    #allocation2 [shape = 'u8[65536]{0}', space=vmem, size = 0x10000, scoped, tag = 'output window, operand 0, single buffered']
    #allocation3 [shape = 's32[1]{0}', space=sflag, size = 0x4, scoped, tag = 'scoped memory for tpu_custom_call.1']
    %8 = vsyncpa [#allocation3], 0
    // Predicated region
    $region2: #{tpu_custom_call.1} parent=1 // pred_check
      _
    $region3: #{tpu_custom_call.1} parent=1 // pred_check_branch
      %10 = sbr.rel (0) target = $region5
    $region4: #{tpu_custom_call.1} parent=1 // pred_region
      _
    $region5: #{tpu_custom_call.1} parent=1 // pred_fallthru
      _
    // Predicated region
    $region6: #{tpu_custom_call.1} parent=1 // pred_check
      _
    $region7: #{tpu_custom_call.1} parent=1 // pred_check_branch
      %12 = sbr.rel (0) target = $region9
    $region8: #{tpu_custom_call.1} parent=1 // pred_region
      _
    $region9: #{tpu_custom_call.1} parent=1 // pred_fallthru
      _
    // Predicated region
    $region10: #{tpu_custom_call.1} parent=1 // pred_check
      _
    $region11: #{tpu_custom_call.1} parent=1 // pred_check_branch
      %14 = sbr.rel (0) target = $region13
    $region12: #{tpu_custom_call.1} parent=1 // pred_region
      _
    $region13: #{tpu_custom_call.1} parent=1 // pred_fallthru
      _
    %v16 = vld [vmem:[%s0] sm:$0xf]
    %v17 = vld [vmem:[%s0 + $0x4] sm:$0xf]
    %v18 = vld [vmem:[%s0 + $0x8] sm:$0xf]
    %v19 = vld [vmem:[%s0 + $0xc] sm:$0xf]
    %v20 = vld [vmem:[%s0 + $0x10] sm:$0xf]
    %v21 = vld [vmem:[%s0 + $0x14] sm:$0xf]
    %v22 = vld [vmem:[%s0 + $0x18] sm:$0xf]
    %v23 = vld [vmem:[%s0 + $0x1c] sm:$0xf]
    %v24 = vld [vmem:[%s1] sm:$0xff]
    %v25 = vld [vmem:[%s1 + $0x8] sm:$0xff]
    %v26 = vld [vmem:[%s1 + $0x10] sm:$0xff]
    %v27 = vld [vmem:[%s1 + $0x18] sm:$0xff]
    %v28 = vld [vmem:[%s2] sm:$0xf]
    %v30 = vlaneseq
    %v31 = vshrl.u32 %v30, 7
    %v32 = vsub.s32 0, %v31
    %v33 = vrot.slane %v28, %v32
    %v34 = vlaneseq
    %v35 = vshrl.u32 %v34, 7
    %v36 = vsub.s32 1, %v35
    %v37 = vrot.slane %v28, %v36
    %v38 = vlaneseq
    %v39 = vshrl.u32 %v38, 7
    %v40 = vsub.s32 2, %v39
    %v41 = vrot.slane %v28, %v40
    %v42 = vlaneseq
    %v43 = vshrl.u32 %v42, 7
    %v44 = vsub.s32 3, %v43
    %v45 = vrot.slane %v28, %v44
    %v58 = vunpack.c.l.b16 %v16
    %v59 = vunpack.c.l.b16 %v17
    %v60 = vunpack.c.l.b16 %v18
    %v61 = vunpack.c.l.b16 %v19
    %v62 = vunpack.c.l.b16 %v20
    %v63 = vunpack.c.l.b16 %v21
    %v64 = vunpack.c.l.b16 %v22
    %v65 = vunpack.c.l.b16 %v23
    %v66 = vpack.c.b16 %v59, %v58
    %v67 = vpack.c.b16 %v61, %v60
    %v68 = vpack.c.b16 %v63, %v62
    %v69 = vpack.c.b16 %v65, %v64
    %v74 = vunpack.c.l.b16 %v24
    %v75 = vunpack.c.h.b16 %v24
    %v76 = vunpack.c.l.b16 %v25
    %v77 = vunpack.c.h.b16 %v25
    %v78 = vunpack.c.l.b16 %v26
    %v79 = vunpack.c.h.b16 %v26
    %v80 = vunpack.c.l.b16 %v27
    %v81 = vunpack.c.h.b16 %v27
    %v82 = vpack.c.b16 %v78, %v74
    %v83 = vpack.c.b16 %v79, %v75
    %v84 = vpack.c.b16 %v80, %v76
    %v85 = vpack.c.b16 %v81, %v77
    %vm90 = vcmask 130048
    %v92 = vsel %vm90, %v66, 0
    %v95 = vsel %vm90, %v67, 0
    %v98 = vsel %vm90, %v68, 0
    %v101 = vsel %vm90, %v69, 0
    %103 = vmatprep.subr.bf16.mxu0 %v83
    %104 = vmatpush1.bf16.msra.mxu0 %v82
    %105 = vmatprep.subr.bf16.mxu0 0
    %106 = vmatpush1.bf16.msra.mxu0 0
    %107 = vmatprep.subr.bf16.mxu0 0
    %108 = vmatpush1.bf16.msra.mxu0 0
    %109 = vmatprep.subr.bf16.mxu0 0
    %110 = vmatpush1.bf16.msra.mxu0 0
    %111 = vmatprep.subr.bf16.mxu0 0
    %112 = vmatpush1.bf16.msra.mxu0 0
    %113 = vmatprep.subr.bf16.mxu0 0
    %114 = vmatpush1.bf16.msra.mxu0 0
    %115 = vmatprep.subr.bf16.mxu0 0
    %116 = vmatpush1.bf16.msra.mxu0 0
    %117 = vmatprep.subr.bf16.mxu0 0
    %118 = vmatpush1.bf16.msra.mxu0 0
    %119 = vmatprep.subr.bf16.mxu0 0
    %120 = vmatpush1.bf16.msra.mxu0 0
    %121 = vmatprep.subr.bf16.mxu0 0
    %122 = vmatpush1.bf16.msra.mxu0 0
    %123 = vmatprep.subr.bf16.mxu0 0
    %124 = vmatpush1.bf16.msra.mxu0 0
    %125 = vmatprep.subr.bf16.mxu0 0
    %126 = vmatpush1.bf16.msra.mxu0 0
    %127 = vmatprep.subr.bf16.mxu0 0
    %128 = vmatpush1.bf16.msra.mxu0 0
    %129 = vmatprep.subr.bf16.mxu0 0
    %130 = vmatpush1.bf16.msra.mxu0 0
    %131 = vmatprep.subr.bf16.mxu0 0
    %132 = vmatpush1.bf16.msra.mxu0 0
    %133 = vmatprep.subr.bf16.mxu0 0
    %134 = vmatpush1.bf16.msra.mxu0 0
    %135 = vmatprep.mubr.bf16.mxu0 0
    %136 = vmatmul.mubr.bf16.gmra.mrb[0].mxu0 %v92
    %v137 = vpop.f32.mrb[0].mxu0
    %v138 = vadd.f32 %v33, %v137
    %v139 = vpop.f32.mrb[0].mxu0
    %v140 = vadd.f32 %v37, %v139
    %v141 = vpop.f32.mrb[0].mxu0
    %v142 = vadd.f32 %v33, %v141
    %v143 = vpop.f32.mrb[0].mxu0
    %v144 = vadd.f32 %v37, %v143
    %145 = vmatprep.mubr.bf16.mxu0 0
    %146 = vmatmul.mubr.bf16.gmra.mrb[0].mxu0 %v95
    %v147 = vpop.f32.mrb[0].mxu0
    %v148 = vadd.f32 %v33, %v147
    %v149 = vpop.f32.mrb[0].mxu0
    %v150 = vadd.f32 %v37, %v149
    %v151 = vpop.f32.mrb[0].mxu0
    %v152 = vadd.f32 %v33, %v151
    %v153 = vpop.f32.mrb[0].mxu0
    %v154 = vadd.f32 %v37, %v153
    %155 = vmatprep.mubr.bf16.mxu0 0
    %156 = vmatmul.mubr.bf16.gmra.mrb[0].mxu0 %v98
    %v157 = vpop.f32.mrb[0].mxu0
    %v158 = vadd.f32 %v33, %v157
    %v159 = vpop.f32.mrb[0].mxu0
    %v160 = vadd.f32 %v37, %v159
    %v161 = vpop.f32.mrb[0].mxu0
    %v162 = vadd.f32 %v33, %v161
    %v163 = vpop.f32.mrb[0].mxu0
    %v164 = vadd.f32 %v37, %v163
    %165 = vmatprep.mubr.bf16.mxu0 0
    %166 = vmatmul.mubr.bf16.gmra.mrb[0].mxu0 %v101
    %v167 = vpop.f32.mrb[0].mxu0
    %v168 = vadd.f32 %v33, %v167
    %v169 = vpop.f32.mrb[0].mxu0
    %v170 = vadd.f32 %v37, %v169
    %v171 = vpop.f32.mrb[0].mxu0
    %v172 = vadd.f32 %v33, %v171
    %v173 = vpop.f32.mrb[0].mxu0
    %v174 = vadd.f32 %v37, %v173
    %175 = vdwg.mxu0
    %176 = vmatprep.subr.bf16.mxu0 %v85
    %177 = vmatpush1.bf16.msra.mxu0 %v84
    %178 = vmatprep.subr.bf16.mxu0 0
    %179 = vmatpush1.bf16.msra.mxu0 0
    %180 = vmatprep.subr.bf16.mxu0 0
    %181 = vmatpush1.bf16.msra.mxu0 0
    %182 = vmatprep.subr.bf16.mxu0 0
    %183 = vmatpush1.bf16.msra.mxu0 0
    %184 = vmatprep.subr.bf16.mxu0 0
    %185 = vmatpush1.bf16.msra.mxu0 0
    %186 = vmatprep.subr.bf16.mxu0 0
    %187 = vmatpush1.bf16.msra.mxu0 0
    %188 = vmatprep.subr.bf16.mxu0 0
    %189 = vmatpush1.bf16.msra.mxu0 0
    %190 = vmatprep.subr.bf16.mxu0 0
    %191 = vmatpush1.bf16.msra.mxu0 0
    %192 = vmatprep.subr.bf16.mxu0 0
    %193 = vmatpush1.bf16.msra.mxu0 0
    %194 = vmatprep.subr.bf16.mxu0 0
    %195 = vmatpush1.bf16.msra.mxu0 0
    %196 = vmatprep.subr.bf16.mxu0 0
    %197 = vmatpush1.bf16.msra.mxu0 0
    %198 = vmatprep.subr.bf16.mxu0 0
    %199 = vmatpush1.bf16.msra.mxu0 0
    %200 = vmatprep.subr.bf16.mxu0 0
    %201 = vmatpush1.bf16.msra.mxu0 0
    %202 = vmatprep.subr.bf16.mxu0 0
    %203 = vmatpush1.bf16.msra.mxu0 0
    %204 = vmatprep.subr.bf16.mxu0 0
    %205 = vmatpush1.bf16.msra.mxu0 0
    %206 = vmatprep.subr.bf16.mxu0 0
    %207 = vmatpush1.bf16.msra.mxu0 0
    %208 = vmatprep.mubr.bf16.mxu0 0
    %209 = vmatmul.mubr.bf16.gmra.mrb[0].mxu0 %v92
    %v210 = vpop.f32.mrb[0].mxu0
    %v211 = vadd.f32 %v41, %v210
    %v212 = vpop.f32.mrb[0].mxu0
    %v213 = vadd.f32 %v45, %v212
    %v214 = vpop.f32.mrb[0].mxu0
    %v215 = vadd.f32 %v41, %v214
    %v216 = vpop.f32.mrb[0].mxu0
    %v217 = vadd.f32 %v45, %v216
    %218 = vmatprep.mubr.bf16.mxu0 0
    %219 = vmatmul.mubr.bf16.gmra.mrb[0].mxu0 %v95
    %v220 = vpop.f32.mrb[0].mxu0
    %v221 = vadd.f32 %v41, %v220
    %v222 = vpop.f32.mrb[0].mxu0
    %v223 = vadd.f32 %v45, %v222
    %v224 = vpop.f32.mrb[0].mxu0
    %v225 = vadd.f32 %v41, %v224
    %v226 = vpop.f32.mrb[0].mxu0
    %v227 = vadd.f32 %v45, %v226
    %228 = vmatprep.mubr.bf16.mxu0 0
    %229 = vmatmul.mubr.bf16.gmra.mrb[0].mxu0 %v98
    %v230 = vpop.f32.mrb[0].mxu0
    %v231 = vadd.f32 %v41, %v230
    %v232 = vpop.f32.mrb[0].mxu0
    %v233 = vadd.f32 %v45, %v232
    %v234 = vpop.f32.mrb[0].mxu0
    %v235 = vadd.f32 %v41, %v234
    %v236 = vpop.f32.mrb[0].mxu0
    %v237 = vadd.f32 %v45, %v236
    %238 = vmatprep.mubr.bf16.mxu0 0
    %239 = vmatmul.mubr.bf16.gmra.mrb[0].mxu0 %v101
    %v240 = vpop.f32.mrb[0].mxu0
    %v241 = vadd.f32 %v41, %v240
    %v242 = vpop.f32.mrb[0].mxu0
    %v243 = vadd.f32 %v45, %v242
    %v244 = vpop.f32.mrb[0].mxu0
    %v245 = vadd.f32 %v41, %v244
    %v246 = vpop.f32.mrb[0].mxu0
    %v247 = vadd.f32 %v45, %v246
    %248 = vdwg.mxu0
    %v249 = vpack.c.bf16 %v142, %v138
    %v250 = vpack.c.bf16 %v144, %v140
    %v251 = vpack.c.bf16 %v215, %v211
    %v252 = vpack.c.bf16 %v217, %v213
    %v253 = vpack.c.bf16 %v152, %v148
    %v254 = vpack.c.bf16 %v154, %v150
    %v255 = vpack.c.bf16 %v225, %v221
    %v256 = vpack.c.bf16 %v227, %v223
    %v257 = vpack.c.bf16 %v162, %v158
    %v258 = vpack.c.bf16 %v164, %v160
    %v259 = vpack.c.bf16 %v235, %v231
    %v260 = vpack.c.bf16 %v237, %v233
    %v261 = vpack.c.bf16 %v172, %v168
    %v262 = vpack.c.bf16 %v174, %v170
    %v263 = vpack.c.bf16 %v245, %v241
    %v264 = vpack.c.bf16 %v247, %v243
    %v281 = vunpack.c.l.b16 %v249
    %v282 = vunpack.c.l.b16 %v250
    %v283 = vunpack.c.l.b16 %v251
    %v284 = vunpack.c.l.b16 %v252
    %v285 = vunpack.c.h.b16 %v249
    %v286 = vunpack.c.h.b16 %v250
    %v287 = vunpack.c.h.b16 %v251
    %v288 = vunpack.c.h.b16 %v252
    %v289 = vunpack.c.l.b16 %v253
    %v290 = vunpack.c.l.b16 %v254
    %v291 = vunpack.c.l.b16 %v255
    %v292 = vunpack.c.l.b16 %v256
    %v293 = vunpack.c.h.b16 %v253
    %v294 = vunpack.c.h.b16 %v254
    %v295 = vunpack.c.h.b16 %v255
    %v296 = vunpack.c.h.b16 %v256
    %v297 = vunpack.c.l.b16 %v257
    %v298 = vunpack.c.l.b16 %v258
    %v299 = vunpack.c.l.b16 %v259
    %v300 = vunpack.c.l.b16 %v260
    %v301 = vunpack.c.h.b16 %v257
    %v302 = vunpack.c.h.b16 %v258
    %v303 = vunpack.c.h.b16 %v259
    %v304 = vunpack.c.h.b16 %v260
    %v305 = vunpack.c.l.b16 %v261
    %v306 = vunpack.c.l.b16 %v262
    %v307 = vunpack.c.l.b16 %v263
    %v308 = vunpack.c.l.b16 %v264
    %v309 = vunpack.c.h.b16 %v261
    %v310 = vunpack.c.h.b16 %v262
    %v311 = vunpack.c.h.b16 %v263
    %v312 = vunpack.c.h.b16 %v264
    %v313 = vpack.c.b16 %v282, %v281
    %v314 = vpack.c.b16 %v284, %v283
    %v315 = vpack.c.b16 %v286, %v285
    %v316 = vpack.c.b16 %v288, %v287
    %v317 = vpack.c.b16 %v290, %v289
    %v318 = vpack.c.b16 %v292, %v291
    %v319 = vpack.c.b16 %v294, %v293
    %v320 = vpack.c.b16 %v296, %v295
    %v321 = vpack.c.b16 %v298, %v297
    %v322 = vpack.c.b16 %v300, %v299
    %v323 = vpack.c.b16 %v302, %v301
    %v324 = vpack.c.b16 %v304, %v303
    %v325 = vpack.c.b16 %v306, %v305
    %v326 = vpack.c.b16 %v308, %v307
    %v327 = vpack.c.b16 %v310, %v309
    %v328 = vpack.c.b16 %v312, %v311
    %345 = vst [vmem:[#allocation2] sm:$0xff] %v313
    %346 = vst [vmem:[#allocation2 + $0x8] sm:$0xff] %v314
    %347 = vst [vmem:[#allocation2 + $0x10] sm:$0xff] %v315
    %348 = vst [vmem:[#allocation2 + $0x18] sm:$0xff] %v316
    %349 = vst [vmem:[#allocation2 + $0x20] sm:$0xff] %v317
    %350 = vst [vmem:[#allocation2 + $0x28] sm:$0xff] %v318
    %351 = vst [vmem:[#allocation2 + $0x30] sm:$0xff] %v319
    %352 = vst [vmem:[#allocation2 + $0x38] sm:$0xff] %v320
    %353 = vst [vmem:[#allocation2 + $0x40] sm:$0xff] %v321
    %354 = vst [vmem:[#allocation2 + $0x48] sm:$0xff] %v322
    %355 = vst [vmem:[#allocation2 + $0x50] sm:$0xff] %v323
    %356 = vst [vmem:[#allocation2 + $0x58] sm:$0xff] %v324
    %357 = vst [vmem:[#allocation2 + $0x60] sm:$0xff] %v325
    %358 = vst [vmem:[#allocation2 + $0x68] sm:$0xff] %v326
    %359 = vst [vmem:[#allocation2 + $0x70] sm:$0xff] %v327
    %360 = vst [vmem:[#allocation2 + $0x78] sm:$0xff] %v328
    // Predicated region
    $region14: #{tpu_custom_call.1} parent=1 // pred_check
      _
    $region15: #{tpu_custom_call.1} parent=1 // pred_check_branch
      %362 = sbr.rel (0) target = $region17
    $region16: #{tpu_custom_call.1} parent=1 // pred_region
      %s364 = ssub.s32 2048, 2048
      %365 = vsyncadd [#allocation3], %s364
      %s366 = sshll.u32 [#allocation2], 4
      %s367 = int_to_ptr.vmem [resolvable:$true] %s366
      %372 = dma.vmem_to_hbm [thread:$0]  %s367, 2048, %s3, [#allocation3], 256, 256, 16
    $region17: #{tpu_custom_call.1} parent=1 // pred_fallthru
      _
    // Predicated region
    $region18: #{tpu_custom_call.1} parent=1 // pred_check
      _
    $region19: #{tpu_custom_call.1} parent=1 // pred_check_branch
      %374 = sbr.rel (0) target = $region21
    $region20: #{tpu_custom_call.1} parent=1 // pred_region
      %375 = dma.done [#allocation3], 2048
    $region21: #{tpu_custom_call.1} parent=1 // pred_fallthru
      _
    %376 = vsyncpa [#allocation3], 1

</llo_original>
